<compile_context>
chip_gen: v5e
topology: v5e:2x2
jax: 0.10.0
libtpu: 0.0.40
codegen_flags: <defaults>
</compile_context>

<pallas_src>
import jax
import jax.numpy as jnp
from jax.experimental import pallas as pl
from jax.experimental.pallas import tpu as pltpu


def _make_mha_kernel(*, has_mask, return_attn, eps):
    """Build the kernel body for one (batch, q-tile, head) grid step."""

    def kernel(*refs):
        it = iter(refs)
        q_ref = next(it)                              # (1, tq, d_model) input dtype
        kT_ref = next(it)                             # (1, 1, d_k, Lk)  pre-projected K^T
        v_ref = next(it)                              # (1, 1, Lk, d_v)  pre-projected V
        mask_ref = next(it) if has_mask else None     # (1, tq, Lk) int8 (nonzero = keep)
        wq_ref = next(it)                             # (1, d_model, d_k) 1/sqrt(d_k) folded
        wfc_ref = next(it)                            # (1, d_v, d_model)
        gamma_ref = next(it)                          # (1, d_model) f32
        beta_ref = next(it)                           # (1, d_model) f32
        out_ref = next(it)                            # (1, tq, d_model)
        attn_ref = next(it) if return_attn else None  # (1, 1, tq, Lk)
        fc_ref = next(it)                             # (1, tq, d_model)
        acc_ref = next(it)                            # (tq, d_model) f32 scratch

        h = pl.program_id(2)

        @pl.when(h == 0)
        def _():
            acc_ref[...] = jnp.zeros_like(acc_ref)

        cdt = wq_ref.dtype                            # compute dtype (bf16 by default)
        q = q_ref[0]                                  # (tq, d_model), original dtype

        # Per-head Q projection (scale pre-folded into W_q in the wrapper).
        qh = jnp.dot(q.astype(cdt), wq_ref[0],
                     preferred_element_type=jnp.float32)            # (tq, d_k)

        # Scores: plain NN matmul against the pre-transposed K projection.
        scores = jnp.dot(qh.astype(cdt), kT_ref[0, 0],
                         preferred_element_type=jnp.float32)        # (tq, Lk)

        if has_mask:
            keep = mask_ref[0].astype(jnp.float32) != 0.0
            scores = jnp.where(keep, scores, jnp.float32(-1e9))

        # Numerically-stable softmax; f32 math, exact division.
        scores = scores - jnp.max(scores, axis=-1, keepdims=True)
        e = jnp.exp(scores)
        attn = e / jnp.sum(e, axis=-1, keepdims=True)

        if return_attn:
            attn_ref[0, 0] = attn.astype(attn_ref.dtype)

        # TODO(synk): attention-dropout / output-dropout are identity at
        #             inference; training-mode stochastic dropout not implemented.

        # Head contribution to fc(concat): (attn @ Vh) @ W_fc[h] -> accumulate.
        ctx = jnp.dot(attn.astype(cdt), v_ref[0, 0],
                      preferred_element_type=jnp.float32)           # (tq, d_v)
        acc_ref[...] += jnp.dot(ctx.astype(cdt), wfc_ref[0],
                                preferred_element_type=jnp.float32)  # (tq, d_model)

        @pl.when(h == pl.num_programs(2) - 1)
        def _():
            fc_out = acc_ref[...]                                   # (tq, d_model) f32
            fc_ref[0] = fc_out.astype(fc_ref.dtype)

            # residual + LayerNorm(d_model, eps), affine — all in f32.
            x = fc_out + q.astype(jnp.float32)
            mean = jnp.mean(x, axis=-1, keepdims=True)
            var = jnp.mean((x - mean) ** 2, axis=-1, keepdims=True)
            y = (x - mean) * jax.lax.rsqrt(var + eps)
            out_ref[0] = (y * gamma_ref[...] + beta_ref[...]).astype(out_ref.dtype)

    return kernel


def multi_head_attention(q, k, v, mask, params, *, n_head, d_k, d_v,
                         eps=1e-6,
                         compute_dtype=jnp.bfloat16,
                         attn_dtype=None,
                         return_attn=True,
                         block_q=None,
                         vmem_limit_bytes=None):
    """Pallas MHA. q/k/v: [B, L, d_model]; mask: [B, Lq, Lk] (nonzero = keep) or None.

    Weights are [in_features, out_features] (transposed vs. nn.Linear.weight).
    Returns (layernorm_output, attention_weights_or_None, fc_output).
    """
    B, Lq, d_model = q.shape
    Lk = k.shape[1]
    out_dtype = q.dtype
    if attn_dtype is None:
        attn_dtype = out_dtype          # f32 parity by default; pass bf16 for perf

    wq, wk, wv, wfc, gamma, beta = params
    scale = 1.0 / (float(d_k) ** 0.5)

    # ---- wrapper-side K/V projections: one full-width batched GEMM each ----
    kc = k.astype(compute_dtype)
    vc = v.astype(compute_dtype)
    wk_h = wk.reshape(d_model, n_head, d_k).astype(compute_dtype)
    wv_h = wv.reshape(d_model, n_head, d_v).astype(compute_dtype)
    khT = jnp.einsum('bld,dhk->bhkl', kc, wk_h,
                     preferred_element_type=jnp.float32).astype(compute_dtype)
    vh = jnp.einsum('bld,dhv->bhlv', vc, wv_h,
                    preferred_element_type=jnp.float32).astype(compute_dtype)

    # Per-head Q / fc weights for in-kernel use (scale folded into W_q).
    wq_h = (wq * scale).reshape(d_model, n_head, d_k).transpose(1, 0, 2)
    wq_h = wq_h.astype(compute_dtype)
    wfc_h = wfc.reshape(n_head, d_v, d_model).astype(compute_dtype)
    gamma2 = gamma.reshape(1, d_model).astype(jnp.float32)
    beta2 = beta.reshape(1, d_model).astype(jnp.float32)

    has_mask = mask is not None
    if has_mask:
        mask_i8 = (mask != 0).astype(jnp.int8)   # 1 byte/elem HBM stream

    # Query tiling: 256 matches the v6e/v7x MXU M-dim; fall back to 128 / full.
    if block_q is None:
        for cand in (256, 128):
            if Lq % cand == 0:
                block_q = cand
                break
        else:
            block_q = Lq
    assert Lq % block_q == 0, "Lq must be divisible by block_q"
    nq = Lq // block_q

    # Generation-aware VMEM budget (~51 MiB on v7x, ~100 MiB on v5e/v6e).
    if vmem_limit_bytes is None:
        try:
            cap = int(pltpu.get_tpu_info().vmem_capacity_bytes)
        except Exception:
            cap = 64 * 1024 * 1024
        vmem_limit_bytes = min(int(cap * 0.80), 100 * 1024 * 1024)

    kernel = _make_mha_kernel(has_mask=has_mask, return_attn=return_attn, eps=eps)

    in_specs = [
        pl.BlockSpec((1, block_q, d_model), lambda b, i, h: (b, i, 0)),    # q
        pl.BlockSpec((1, 1, d_k, Lk),       lambda b, i, h: (b, h, 0, 0)), # K_proj^T
        pl.BlockSpec((1, 1, Lk, d_v),       lambda b, i, h: (b, h, 0, 0)), # V_proj
    ]
    inputs = [q, khT, vh]
    if has_mask:
        in_specs.append(pl.BlockSpec((1, block_q, Lk), lambda b, i, h: (b, i, 0)))
        inputs.append(mask_i8)
    in_specs += [
        pl.BlockSpec((1, d_model, d_k), lambda b, i, h: (h, 0, 0)),        # W_q[h]
        pl.BlockSpec((1, d_v, d_model), lambda b, i, h: (h, 0, 0)),        # W_fc[h]
        pl.BlockSpec((1, d_model),      lambda b, i, h: (0, 0)),           # LN gamma
        pl.BlockSpec((1, d_model),      lambda b, i, h: (0, 0)),           # LN beta
    ]
    inputs += [wq_h, wfc_h, gamma2, beta2]

    out_shapes = [jax.ShapeDtypeStruct((B, Lq, d_model), out_dtype)]       # LN output
    out_specs = [pl.BlockSpec((1, block_q, d_model), lambda b, i, h: (b, i, 0))]
    if return_attn:
        out_shapes.append(jax.ShapeDtypeStruct((B, n_head, Lq, Lk), attn_dtype))
        out_specs.append(pl.BlockSpec((1, 1, block_q, Lk),
                                      lambda b, i, h: (b, h, i, 0)))
    out_shapes.append(jax.ShapeDtypeStruct((B, Lq, d_model), out_dtype))   # fc output
    out_specs.append(pl.BlockSpec((1, block_q, d_model), lambda b, i, h: (b, i, 0)))

    grid_spec = pltpu.PrefetchScalarGridSpec(
        num_scalar_prefetch=0,
        grid=(B, nq, n_head),                        # head axis last (reduction)
        in_specs=in_specs,
        out_specs=out_specs,
        scratch_shapes=[
            pltpu.VMEM((block_q, d_model), jnp.float32),   # fc accumulator
        ],
    )

    results = pl.pallas_call(
        kernel,
        out_shape=tuple(out_shapes),
        grid_spec=grid_spec,
        compiler_params=pltpu.CompilerParams(
            dimension_semantics=("parallel", "parallel", "arbitrary"),
            vmem_limit_bytes=vmem_limit_bytes),
    )(*inputs)

    if return_attn:
        out, attn, fc_out = results
    else:
        out, fc_out = results
        attn = None
    return out, attn, fc_out


if __name__ == "__main__":
    # Small deterministic config consistent with the module's forward.
    B, L, d_model = 2, 8, 32
    n_head, d_k, d_v = 2, 16, 16

    key = jax.random.PRNGKey(0)
    kq, kk, kv, k1, k2, k3, k4 = jax.random.split(key, 7)

    q = jax.random.normal(kq, (B, L, d_model), dtype=jnp.float32)
    k = jax.random.normal(kk, (B, L, d_model), dtype=jnp.float32)
    v = jax.random.normal(kv, (B, L, d_model), dtype=jnp.float32)

    # Causal-style mask (1 = attend, 0 = masked), same for every batch element.
    mask = (jnp.arange(L)[:, None] >= jnp.arange(L)[None, :]).astype(jnp.float32)
    mask = jnp.broadcast_to(mask, (B, L, L))

    # Deterministic parameter init (stand-in for nn.Linear weights), [in, out].
    s = 1.0 / jnp.sqrt(jnp.float32(d_model))
    wq = jax.random.normal(k1, (d_model, n_head * d_k), dtype=jnp.float32) * s
    wk = jax.random.normal(k2, (d_model, n_head * d_k), dtype=jnp.float32) * s
    wv = jax.random.normal(k3, (d_model, n_head * d_v), dtype=jnp.float32) * s
    wfc = jax.random.normal(k4, (n_head * d_v, d_model), dtype=jnp.float32) * s
    gamma = jnp.ones((d_model,), dtype=jnp.float32)   # LayerNorm weight
    beta = jnp.zeros((d_model,), dtype=jnp.float32)   # LayerNorm bias

    params = (wq, wk, wv, wfc, gamma, beta)

    out, attn, fc_out = multi_head_attention(
        q, k, v, mask, params, n_head=n_head, d_k=d_k, d_v=d_v)
    jax.block_until_ready((out, attn, fc_out))

    assert out.shape == (B, L, d_model)
    assert attn.shape == (B, n_head, L, L)
    assert fc_out.shape == (B, L, d_model)
    assert bool(jnp.all(jnp.isfinite(out)))
    assert bool(jnp.all(jnp.isfinite(attn)))
    assert bool(jnp.all(jnp.isfinite(fc_out)))
    print("KERNEL_OK")
</pallas_src>

<mosaic_0001>
module attributes {stable_mosaic.version = 11 : i64} {
  func.func @kernel(%arg0: i32, %arg1: i32, %arg2: i32, %arg3: memref<1x8x32xf32, #tpu.memory_space<vmem>>, %arg4: memref<1x1x16x8xbf16, #tpu.memory_space<vmem>>, %arg5: memref<1x1x8x16xbf16, #tpu.memory_space<vmem>>, %arg6: memref<1x8x8xi8, #tpu.memory_space<vmem>>, %arg7: memref<1x32x16xbf16, #tpu.memory_space<vmem>>, %arg8: memref<1x16x32xbf16, #tpu.memory_space<vmem>>, %arg9: memref<1x32xf32, #tpu.memory_space<vmem>>, %arg10: memref<1x32xf32, #tpu.memory_space<vmem>>, %arg11: memref<1x8x32xf32, #tpu.memory_space<vmem>>, %arg12: memref<1x1x8x8xf32, #tpu.memory_space<vmem>>, %arg13: memref<1x8x32xf32, #tpu.memory_space<vmem>>, %arg14: memref<8x32xf32, #tpu.memory_space<vmem>>) attributes {dimension_semantics = [#tpu.dimension_semantics<parallel>, #tpu.dimension_semantics<parallel>, #tpu.dimension_semantics<arbitrary>], iteration_bounds = array<i64: 2, 1, 2>, scalar_prefetch = 0 : i64, scratch_operands = 1 : i64, tpu.core_type = #tpu.core_type<tc>, window_params = [{transform_indices = @transform_0, window_bounds = array<i64: 1, 8, 32>}, {transform_indices = @transform_1, window_bounds = array<i64: 1, 1, 16, 8>}, {transform_indices = @transform_2, window_bounds = array<i64: 1, 1, 8, 16>}, {transform_indices = @transform_3, window_bounds = array<i64: 1, 8, 8>}, {transform_indices = @transform_4, window_bounds = array<i64: 1, 32, 16>}, {transform_indices = @transform_5, window_bounds = array<i64: 1, 16, 32>}, {pipeline_mode = #tpu.pipeline_mode<synchronous>, transform_indices = @transform_6, window_bounds = array<i64: 1, 32>}, {pipeline_mode = #tpu.pipeline_mode<synchronous>, transform_indices = @transform_7, window_bounds = array<i64: 1, 32>}, {transform_indices = @transform_8, window_bounds = array<i64: 1, 8, 32>}, {transform_indices = @transform_9, window_bounds = array<i64: 1, 1, 8, 8>}, {transform_indices = @transform_10, window_bounds = array<i64: 1, 8, 32>}]} {
    %c0_i32 = arith.constant 0 : i32
    %0 = arith.cmpi eq, %arg2, %c0_i32 : i32
    %1 = arith.extui %0 : i1 to i32
    %c0_i32_0 = arith.constant 0 : i32
    %2 = arith.cmpi ne, %1, %c0_i32_0 : i32
    scf.if %2 {
      %cst_36 = arith.constant 0.000000e+00 : f32
      %46 = vector.broadcast %cst_36 : f32 to vector<8x32xf32>
      %c0_37 = arith.constant 0 : index
      %c0_38 = arith.constant 0 : index
      %47 = vector.load %arg14[%c0_37, %c0_38] : memref<8x32xf32, #tpu.memory_space<vmem>>, vector<8x32xf32>
      tpu.vector_store %arg14[%c0_37, %c0_38], %46 {strides = array<i32>} : memref<8x32xf32, #tpu.memory_space<vmem>>, vector<8x32xf32>,
    } else {
    }
    %c0 = arith.constant 0 : index
    %c0_1 = arith.constant 0 : index
    %c0_2 = arith.constant 0 : index
    %3 = vector.load %arg3[%c0, %c0_1, %c0_2] : memref<1x8x32xf32, #tpu.memory_space<vmem>>, vector<1x8x32xf32>
    %4 = vector.shape_cast %3 : vector<1x8x32xf32> to vector<8x32xf32>
    %5 = arith.truncf %4 : vector<8x32xf32> to vector<8x32xbf16>
    %c0_3 = arith.constant 0 : index
    %c0_4 = arith.constant 0 : index
    %c0_5 = arith.constant 0 : index
    %6 = vector.load %arg7[%c0_3, %c0_4, %c0_5] : memref<1x32x16xbf16, #tpu.memory_space<vmem>>, vector<1x32x16xbf16>
    %7 = vector.shape_cast %6 : vector<1x32x16xbf16> to vector<32x16xbf16>
    %cst = arith.constant dense<0.000000e+00> : vector<8x16xf32>
    %8 = tpu.matmul %5, %7, %cst {dimension_numbers = #tpu.dot_dimension_numbers<[1], [0], [0], [1], [0, 0, 1, 1], [], []>} : vector<8x32xbf16>, vector<32x16xbf16>, vector<8x16xf32> -> vector<8x16xf32>
    %9 = arith.truncf %8 : vector<8x16xf32> to vector<8x16xbf16>
    %c0_6 = arith.constant 0 : index
    %c0_7 = arith.constant 0 : index
    %c0_8 = arith.constant 0 : index
    %c0_9 = arith.constant 0 : index
    %10 = vector.load %arg4[%c0_6, %c0_7, %c0_8, %c0_9] : memref<1x1x16x8xbf16, #tpu.memory_space<vmem>>, vector<1x1x16x8xbf16>
    %11 = vector.shape_cast %10 : vector<1x1x16x8xbf16> to vector<16x8xbf16>
    %cst_10 = arith.constant dense<0.000000e+00> : vector<8x8xf32>
    %12 = tpu.matmul %9, %11, %cst_10 {dimension_numbers = #tpu.dot_dimension_numbers<[1], [0], [0], [1], [0, 0, 1, 1], [], []>} : vector<8x16xbf16>, vector<16x8xbf16>, vector<8x8xf32> -> vector<8x8xf32>
    %c0_11 = arith.constant 0 : index
    %c0_12 = arith.constant 0 : index
    %c0_13 = arith.constant 0 : index
    %13 = vector.load %arg6[%c0_11, %c0_12, %c0_13] : memref<1x8x8xi8, #tpu.memory_space<vmem>>, vector<1x8x8xi8>
    %14 = vector.shape_cast %13 : vector<1x8x8xi8> to vector<8x8xi8>
    %15 = arith.sitofp %14 : vector<8x8xi8> to vector<8x8xf32>
    %cst_14 = arith.constant 0.000000e+00 : f32
    %16 = vector.broadcast %cst_14 : f32 to vector<8x8xf32>
    %17 = arith.cmpf one, %15, %16 : vector<8x8xf32>
    %cst_15 = arith.constant -1.000000e+09 : f32
    %18 = vector.broadcast %cst_15 : f32 to vector<8x8xf32>
    %19 = arith.select %17, %12, %18 : vector<8x8xi1>, vector<8x8xf32>
    %cst_16 = arith.constant dense<0xFF800000> : vector<8xf32>
    %20 = vector.multi_reduction <maximumf>, %19, %cst_16 [1] : vector<8x8xf32> to vector<8xf32>
    %21 = vector.shape_cast %20 : vector<8xf32> to vector<8x1xf32>
    %22 = vector.broadcast %21 : vector<8x1xf32> to vector<8x8xf32>
    %23 = arith.subf %19, %22 : vector<8x8xf32>
    %24 = math.exp %23 : vector<8x8xf32>
    %cst_17 = arith.constant dense<0.000000e+00> : vector<8xf32>
    %25 = vector.multi_reduction <add>, %24, %cst_17 [1] : vector<8x8xf32> to vector<8xf32>
    %26 = vector.shape_cast %25 : vector<8xf32> to vector<8x1xf32>
    %27 = vector.broadcast %26 : vector<8x1xf32> to vector<8x8xf32>
    %28 = arith.divf %24, %27 : vector<8x8xf32>
    %c0_18 = arith.constant 0 : index
    %c0_19 = arith.constant 0 : index
    %c0_20 = arith.constant 0 : index
    %c0_21 = arith.constant 0 : index
    %29 = vector.load %arg12[%c0_18, %c0_19, %c0_20, %c0_21] : memref<1x1x8x8xf32, #tpu.memory_space<vmem>>, vector<1x1x8x8xf32>
    %30 = vector.shape_cast %29 : vector<1x1x8x8xf32> to vector<8x8xf32>
    %31 = vector.shape_cast %28 : vector<8x8xf32> to vector<1x1x8x8xf32>
    tpu.vector_store %arg12[%c0_18, %c0_19, %c0_20, %c0_21], %31 {strides = array<i32>} : memref<1x1x8x8xf32, #tpu.memory_space<vmem>>, vector<1x1x8x8xf32>,
    %32 = arith.truncf %28 : vector<8x8xf32> to vector<8x8xbf16>
    %c0_22 = arith.constant 0 : index
    %c0_23 = arith.constant 0 : index
    %c0_24 = arith.constant 0 : index
    %c0_25 = arith.constant 0 : index
    %33 = vector.load %arg5[%c0_22, %c0_23, %c0_24, %c0_25] : memref<1x1x8x16xbf16, #tpu.memory_space<vmem>>, vector<1x1x8x16xbf16>
    %34 = vector.shape_cast %33 : vector<1x1x8x16xbf16> to vector<8x16xbf16>
    %cst_26 = arith.constant dense<0.000000e+00> : vector<8x16xf32>
    %35 = tpu.matmul %32, %34, %cst_26 {dimension_numbers = #tpu.dot_dimension_numbers<[1], [0], [0], [1], [0, 0, 1, 1], [], []>} : vector<8x8xbf16>, vector<8x16xbf16>, vector<8x16xf32> -> vector<8x16xf32>
    %c0_27 = arith.constant 0 : index
    %c0_28 = arith.constant 0 : index
    %36 = vector.load %arg14[%c0_27, %c0_28] : memref<8x32xf32, #tpu.memory_space<vmem>>, vector<8x32xf32>
    %37 = arith.truncf %35 : vector<8x16xf32> to vector<8x16xbf16>
    %c0_29 = arith.constant 0 : index
    %c0_30 = arith.constant 0 : index
    %c0_31 = arith.constant 0 : index
    %38 = vector.load %arg8[%c0_29, %c0_30, %c0_31] : memref<1x16x32xbf16, #tpu.memory_space<vmem>>, vector<1x16x32xbf16>
    %39 = vector.shape_cast %38 : vector<1x16x32xbf16> to vector<16x32xbf16>
    %cst_32 = arith.constant dense<0.000000e+00> : vector<8x32xf32>
    %40 = tpu.matmul %37, %39, %cst_32 {dimension_numbers = #tpu.dot_dimension_numbers<[1], [0], [0], [1], [0, 0, 1, 1], [], []>} : vector<8x16xbf16>, vector<16x32xbf16>, vector<8x32xf32> -> vector<8x32xf32>
    %41 = arith.addf %36, %40 : vector<8x32xf32>
    %c0_33 = arith.constant 0 : index
    %c0_34 = arith.constant 0 : index
    %42 = vector.load %arg14[%c0_33, %c0_34] : memref<8x32xf32, #tpu.memory_space<vmem>>, vector<8x32xf32>
    tpu.vector_store %arg14[%c0_33, %c0_34], %41 {strides = array<i32>} : memref<8x32xf32, #tpu.memory_space<vmem>>, vector<8x32xf32>,
    %c1_i32 = arith.constant 1 : i32
    %43 = arith.cmpi eq, %arg2, %c1_i32 : i32
    %44 = arith.extui %43 : i1 to i32
    %c0_i32_35 = arith.constant 0 : i32
    %45 = arith.cmpi ne, %44, %c0_i32_35 : i32
    scf.if %45 {
      %c0_36 = arith.constant 0 : index
      %c0_37 = arith.constant 0 : index
      %46 = vector.load %arg14[%c0_36, %c0_37] : memref<8x32xf32, #tpu.memory_space<vmem>>, vector<8x32xf32>
      %c0_38 = arith.constant 0 : index
      %c0_39 = arith.constant 0 : index
      %c0_40 = arith.constant 0 : index
      %47 = vector.load %arg13[%c0_38, %c0_39, %c0_40] : memref<1x8x32xf32, #tpu.memory_space<vmem>>, vector<1x8x32xf32>
      %48 = vector.shape_cast %47 : vector<1x8x32xf32> to vector<8x32xf32>
      %49 = vector.shape_cast %46 : vector<8x32xf32> to vector<1x8x32xf32>
      tpu.vector_store %arg13[%c0_38, %c0_39, %c0_40], %49 {strides = array<i32>} : memref<1x8x32xf32, #tpu.memory_space<vmem>>, vector<1x8x32xf32>,
      %50 = arith.addf %46, %4 : vector<8x32xf32>
      %cst_41 = arith.constant dense<0.000000e+00> : vector<8xf32>
      %51 = vector.multi_reduction <add>, %50, %cst_41 [1] : vector<8x32xf32> to vector<8xf32>
      %52 = vector.shape_cast %51 : vector<8xf32> to vector<8x1xf32>
      %cst_42 = arith.constant 3.200000e+01 : f32
      %53 = vector.broadcast %cst_42 : f32 to vector<8x1xf32>
      %54 = arith.divf %52, %53 : vector<8x1xf32>
      %55 = vector.broadcast %54 : vector<8x1xf32> to vector<8x32xf32>
      %56 = arith.subf %50, %55 : vector<8x32xf32>
      %57 = arith.mulf %56, %56 : vector<8x32xf32>
      %cst_43 = arith.constant dense<0.000000e+00> : vector<8xf32>
      %58 = vector.multi_reduction <add>, %57, %cst_43 [1] : vector<8x32xf32> to vector<8xf32>
      %59 = vector.shape_cast %58 : vector<8xf32> to vector<8x1xf32>
      %cst_44 = arith.constant 3.200000e+01 : f32
      %60 = vector.broadcast %cst_44 : f32 to vector<8x1xf32>
      %61 = arith.divf %59, %60 : vector<8x1xf32>
      %62 = vector.broadcast %54 : vector<8x1xf32> to vector<8x32xf32>
      %63 = arith.subf %50, %62 : vector<8x32xf32>
      %cst_45 = arith.constant 9.99999997E-7 : f32
      %64 = vector.broadcast %cst_45 : f32 to vector<8x1xf32>
      %65 = arith.addf %61, %64 : vector<8x1xf32>
      %66 = math.rsqrt %65 : vector<8x1xf32>
      %67 = vector.broadcast %66 : vector<8x1xf32> to vector<8x32xf32>
      %68 = arith.mulf %63, %67 : vector<8x32xf32>
      %c0_46 = arith.constant 0 : index
      %c0_47 = arith.constant 0 : index
      %69 = vector.load %arg9[%c0_46, %c0_47] : memref<1x32xf32, #tpu.memory_space<vmem>>, vector<1x32xf32>
      %70 = vector.broadcast %69 : vector<1x32xf32> to vector<8x32xf32>
      %71 = arith.mulf %68, %70 : vector<8x32xf32>
      %c0_48 = arith.constant 0 : index
      %c0_49 = arith.constant 0 : index
      %72 = vector.load %arg10[%c0_48, %c0_49] : memref<1x32xf32, #tpu.memory_space<vmem>>, vector<1x32xf32>
      %73 = vector.broadcast %72 : vector<1x32xf32> to vector<8x32xf32>
      %74 = arith.addf %71, %73 : vector<8x32xf32>
      %c0_50 = arith.constant 0 : index
      %c0_51 = arith.constant 0 : index
      %c0_52 = arith.constant 0 : index
      %75 = vector.load %arg11[%c0_50, %c0_51, %c0_52] : memref<1x8x32xf32, #tpu.memory_space<vmem>>, vector<1x8x32xf32>
      %76 = vector.shape_cast %75 : vector<1x8x32xf32> to vector<8x32xf32>
      %77 = vector.shape_cast %74 : vector<8x32xf32> to vector<1x8x32xf32>
      tpu.vector_store %arg11[%c0_50, %c0_51, %c0_52], %77 {strides = array<i32>} : memref<1x8x32xf32, #tpu.memory_space<vmem>>, vector<1x8x32xf32>,
    } else {
    }
    return
  }
  func.func @transform_0(%arg0: i32, %arg1: i32, %arg2: i32) -> (i32, i32, i32) {
    %c0_i32 = arith.constant 0 : i32
    %c0_i32_0 = arith.constant 0 : i32
    return %arg0, %arg1, %c0_i32 : i32, i32, i32
  }
  func.func @transform_1(%arg0: i32, %arg1: i32, %arg2: i32) -> (i32, i32, i32, i32) {
    %c0_i32 = arith.constant 0 : i32
    %c0_i32_0 = arith.constant 0 : i32
    %c0_i32_1 = arith.constant 0 : i32
    return %arg0, %arg2, %c0_i32, %c0_i32_0 : i32, i32, i32, i32
  }
  func.func @transform_2(%arg0: i32, %arg1: i32, %arg2: i32) -> (i32, i32, i32, i32) {
    %c0_i32 = arith.constant 0 : i32
    %c0_i32_0 = arith.constant 0 : i32
    %c0_i32_1 = arith.constant 0 : i32
    return %arg0, %arg2, %c0_i32, %c0_i32_0 : i32, i32, i32, i32
  }
  func.func @transform_3(%arg0: i32, %arg1: i32, %arg2: i32) -> (i32, i32, i32) {
    %c0_i32 = arith.constant 0 : i32
    %c0_i32_0 = arith.constant 0 : i32
    return %arg0, %arg1, %c0_i32 : i32, i32, i32
  }
  func.func @transform_4(%arg0: i32, %arg1: i32, %arg2: i32) -> (i32, i32, i32) {
    %c0_i32 = arith.constant 0 : i32
    %c0_i32_0 = arith.constant 0 : i32
    %c0_i32_1 = arith.constant 0 : i32
    return %arg2, %c0_i32, %c0_i32_0 : i32, i32, i32
  }
  func.func @transform_5(%arg0: i32, %arg1: i32, %arg2: i32) -> (i32, i32, i32) {
    %c0_i32 = arith.constant 0 : i32
    %c0_i32_0 = arith.constant 0 : i32
    %c0_i32_1 = arith.constant 0 : i32
    return %arg2, %c0_i32, %c0_i32_0 : i32, i32, i32
  }
  func.func @transform_6(%arg0: i32, %arg1: i32, %arg2: i32) -> (i32, i32) {
    %c0_i32 = arith.constant 0 : i32
    %c0_i32_0 = arith.constant 0 : i32
    %c0_i32_1 = arith.constant 0 : i32
    return %c0_i32, %c0_i32_0 : i32, i32
  }
  func.func @transform_7(%arg0: i32, %arg1: i32, %arg2: i32) -> (i32, i32) {
    %c0_i32 = arith.constant 0 : i32
    %c0_i32_0 = arith.constant 0 : i32
    %c0_i32_1 = arith.constant 0 : i32
    return %c0_i32, %c0_i32_0 : i32, i32
  }
  func.func @transform_8(%arg0: i32, %arg1: i32, %arg2: i32) -> (i32, i32, i32) {
    %c0_i32 = arith.constant 0 : i32
    %c0_i32_0 = arith.constant 0 : i32
    return %arg0, %arg1, %c0_i32 : i32, i32, i32
  }
  func.func @transform_9(%arg0: i32, %arg1: i32, %arg2: i32) -> (i32, i32, i32, i32) {
    %c0_i32 = arith.constant 0 : i32
    %c0_i32_0 = arith.constant 0 : i32
    return %arg0, %arg2, %arg1, %c0_i32 : i32, i32, i32, i32
  }
  func.func @transform_10(%arg0: i32, %arg1: i32, %arg2: i32) -> (i32, i32, i32) {
    %c0_i32 = arith.constant 0 : i32
    %c0_i32_0 = arith.constant 0 : i32
    return %arg0, %arg1, %c0_i32 : i32, i32, i32
  }
}

</mosaic_0001>

<llo_original>
// kernel: tpu_custom_call.1
$region0: #{tpu_custom_call.1}
  #allocation0 [shape = 'u32[]', space=smem, size = 0x4, offset = 0x4, fixed_abs, tag = 'smem constant byte address 0x4 - core index']
  #allocation1 [shape = 'u32[72,128]{1,0:T(1,128)}', space=vmem, size = 0x9000, scoped, tag = 'internal scratch']
  #allocation2 [shape = 'f32[8,32]{1,0:T(8,128)}', space=vmem, size = 0x1000, scoped, tag = 'scratch operand']
  %s0 = inlined_call_operand.vmem [shape: f32[2,8,32], index: 0, kind: input, shape index: {}]
  %s1 = inlined_call_operand.vmem [shape: bf16[2,2,16,8], index: 1, kind: input, shape index: {}]
  %s2 = inlined_call_operand.vmem [shape: bf16[2,2,8,16], index: 2, kind: input, shape index: {}]
  %s3 = inlined_call_operand.vmem [shape: s8[2,8,8], index: 3, kind: input, shape index: {}]
  %s4 = inlined_call_operand.vmem [shape: bf16[2,32,16], index: 4, kind: input, shape index: {}]
  %s5 = inlined_call_operand.vmem [shape: bf16[2,16,32], index: 5, kind: input, shape index: {}]
  %s6 = inlined_call_operand.vmem [shape: f32[1,32], index: 6, kind: input, shape index: {}]
  %s7 = inlined_call_operand.vmem [shape: f32[1,32], index: 7, kind: input, shape index: {}]
  %s8 = inlined_call_operand.hbm [shape: f32[2,8,32], index: 8, kind: output, shape index: {0}]
  %s9 = inlined_call_operand.hbm [shape: f32[2,2,8,8], index: 9, kind: output, shape index: {1}]
  %s10 = inlined_call_operand.hbm [shape: f32[2,8,32], index: 10, kind: output, shape index: {2}]
  %11 = xla_tuple %s8, %s9, %s10
  %s12 = sld [smem:[#allocation0]]
  $region89: #{tpu_custom_call.1} parent=0
    _
  %s14 = ssub.s32 1, %s12
  %s15 = scalar_select 0, %s14, %s12
  $region1: #{tpu_custom_call.1} parent=0
    #allocation3 [shape = 'u8[8192]{0}', space=vmem, size = 0x2000, scoped, tag = 'output window, operand 0']
    #allocation4 [shape = 's32[2]{0}', space=sflag, size = 0x8, scoped, tag = 'scoped memory for tpu_custom_call.1']
    #allocation5 [shape = 'u8[8192]{0}', space=vmem, size = 0x2000, scoped, tag = 'output window, operand 1']
    #allocation6 [shape = 's32[2]{0}', space=sflag, size = 0x8, scoped, tag = 'scoped memory for tpu_custom_call.1']
    #allocation7 [shape = 'u8[8192]{0}', space=vmem, size = 0x2000, scoped, tag = 'output window, operand 2']
    %16 = vsyncpa [#allocation4], 0
    %s17 = scalar_lea.sflag [#allocation4], 1
    %18 = vsyncpa %s17, 0
    %19 = vsyncpa [#allocation6], 0
    %s20 = scalar_lea.sflag [#allocation6], 1
    %21 = vsyncpa %s20, 0
    loop: start=0, step=1, limit=6
    $region2: #{tpu_custom_call.1} parent=1 // loop_pre_header
      _
    $region3: #{tpu_custom_call.1} parent=1 // loop_header
      %s23 = sphi 0, %s27
      %p24 = scmp.ge.s32.totalorder %s23, 6
      %s30 = sphi 0, %s49
      %s31 = sphi 0, %s45
      %s32 = sphi 0, %s41
      %s33 = sphi 0, %s30
      %s34 = sphi 0, %s31
      %s35 = sphi 0, %s32
      %s36 = sphi 0, %s33
      %s37 = sphi 0, %s34
      %s38 = sphi 0, %s35
      %s54 = sphi 0, %s56
      %s57 = sphi 0, %s54
      %s58 = sphi 0, %s57
      %s74 = sphi 0, %s58
      %s82 = sphi 0, %s84
      %s85 = sphi 0, %s82
      %s86 = sphi 0, %s85
      %s102 = sphi 0, %s86
      %s110 = sphi 0, %s112
      %s113 = sphi 0, %s110
      %s114 = sphi 0, %s113
      %s130 = sphi 0, %s114
      %s138 = sphi 0, %s140
      %s141 = sphi 0, %s138
      %s142 = sphi 0, %s141
      %s158 = sphi 0, %s142
      %s164 = sphi 0, %s166
      %s167 = sphi 0, %s164
      %s168 = sphi 0, %s167
      %s184 = sphi 0, %s168
      %s190 = sphi 0, %s192
      %s193 = sphi 0, %s190
      %s194 = sphi 0, %s193
      %s210 = sphi 0, %s194
      %s214 = sphi 0, %s214
      %s216 = sphi 0, %s214
      %s217 = sphi 0, %s216
      %s231 = sphi 0, %s217
      %s235 = sphi 0, %s235
      %s237 = sphi 0, %s235
      %s238 = sphi 0, %s237
      %s252 = sphi 0, %s238
      %s260 = sphi 0, %s262
      %s263 = sphi 0, %s260
      %s264 = sphi 0, %s263
      %s280 = sphi 0, %s264
      %s290 = sphi 0, %s292
      %s293 = sphi 0, %s290
      %s294 = sphi 0, %s293
      %s310 = sphi 0, %s294
      %s318 = sphi 0, %s320
      %s321 = sphi 0, %s318
      %s322 = sphi 0, %s321
      %s338 = sphi 0, %s322
    $region4: #{tpu_custom_call.1} parent=1 // loop_header_branch
      %26 = sbr.rel (%p24) target = $region8
    $region5: #{tpu_custom_call.1} parent=1 // loop_body
      %s28 = ssub.s32 %s23, 1
      %s29 = ssub.s32 %s23, 2
      %s39 = sadd.s32 1, %s32
      %p40 = scmp.ge.s32.totalorder %s39, 2
      %s41 = scalar_select %p40, 0, %s39
      %s42 = sadd.s32 1, %s31
      %s43 = scalar_select %p40, %s42, %s31
      %p44 = scmp.ge.s32.totalorder %s43, 1
      %s45 = scalar_select %p44, 0, %s43
      %s46 = sadd.s32 1, %s30
      %s47 = scalar_select %p44, %s46, %s30
      %p48 = scmp.ge.s32.totalorder %s47, 2
      %s49 = scalar_select %p48, 0, %s47
      %s50 = ssub.s32 %s30, %s49
      %s51 = ssub.s32 %s31, %s45
      %s52 = sor.u32 %s50, %s51
      %p53 = scmp.eq.s32.totalorder %s52, 0
      %s55 = sadd.s32 %s54, 1
      %s56 = scalar_select %p53, %s54, %s55
      %p59 = pneg %p53
      %p60 = scmp.eq.s32.totalorder %s23, 3
      %p61 = por %p59, %p60
      %p62 = scmp.ne.s32.totalorder %s54, %s57
      %p63 = scmp.eq.s32.totalorder %s23, 0
      %p64 = por %p62, %p63
      %p65 = scmp.ne.s32.totalorder %s54, %s57
      %p66 = scmp.eq.s32.totalorder %s28, 3
      %p67 = por %p65, %p66
      %p68 = scmp.ne.s32.totalorder %s57, %s58
      %p69 = scmp.eq.s32.totalorder %s28, 0
      %p70 = por %p68, %p69
      %p71 = scmp.ne.s32.totalorder %s57, %s58
      %p72 = scmp.eq.s32.totalorder %s29, 3
      %p73 = por %p71, %p72
      %p75 = scmp.ne.s32.totalorder %s58, %s74
      %p76 = scmp.eq.s32.totalorder %s29, 0
      %p77 = por %p75, %p76
      %s78 = ssub.s32 %s30, %s49
      %s79 = ssub.s32 %s32, %s41
      %s80 = sor.u32 %s78, %s79
      %p81 = scmp.eq.s32.totalorder %s80, 0
      %s83 = sadd.s32 %s82, 1
      %s84 = scalar_select %p81, %s82, %s83
      %p87 = pneg %p81
      %p88 = scmp.eq.s32.totalorder %s23, 3
      %p89 = por %p87, %p88
      %p90 = scmp.ne.s32.totalorder %s82, %s85
      %p91 = scmp.eq.s32.totalorder %s23, 0
      %p92 = por %p90, %p91
      %p93 = scmp.ne.s32.totalorder %s82, %s85
      %p94 = scmp.eq.s32.totalorder %s28, 3
      %p95 = por %p93, %p94
      %p96 = scmp.ne.s32.totalorder %s85, %s86
      %p97 = scmp.eq.s32.totalorder %s28, 0
      %p98 = por %p96, %p97
      %p99 = scmp.ne.s32.totalorder %s85, %s86
      %p100 = scmp.eq.s32.totalorder %s29, 3
      %p101 = por %p99, %p100
      %p103 = scmp.ne.s32.totalorder %s86, %s102
      %p104 = scmp.eq.s32.totalorder %s29, 0
      %p105 = por %p103, %p104
      %s106 = ssub.s32 %s30, %s49
      %s107 = ssub.s32 %s32, %s41
      %s108 = sor.u32 %s106, %s107
      %p109 = scmp.eq.s32.totalorder %s108, 0
      %s111 = sadd.s32 %s110, 1
      %s112 = scalar_select %p109, %s110, %s111
      %p115 = pneg %p109
      %p116 = scmp.eq.s32.totalorder %s23, 3
      %p117 = por %p115, %p116
      %p118 = scmp.ne.s32.totalorder %s110, %s113
      %p119 = scmp.eq.s32.totalorder %s23, 0
      %p120 = por %p118, %p119
      %p121 = scmp.ne.s32.totalorder %s110, %s113
      %p122 = scmp.eq.s32.totalorder %s28, 3
      %p123 = por %p121, %p122
      %p124 = scmp.ne.s32.totalorder %s113, %s114
      %p125 = scmp.eq.s32.totalorder %s28, 0
      %p126 = por %p124, %p125
      %p127 = scmp.ne.s32.totalorder %s113, %s114
      %p128 = scmp.eq.s32.totalorder %s29, 3
      %p129 = por %p127, %p128
      %p131 = scmp.ne.s32.totalorder %s114, %s130
      %p132 = scmp.eq.s32.totalorder %s29, 0
      %p133 = por %p131, %p132
      %s134 = ssub.s32 %s30, %s49
      %s135 = ssub.s32 %s31, %s45
      %s136 = sor.u32 %s134, %s135
      %p137 = scmp.eq.s32.totalorder %s136, 0
      %s139 = sadd.s32 %s138, 1
      %s140 = scalar_select %p137, %s138, %s139
      %p143 = pneg %p137
      %p144 = scmp.eq.s32.totalorder %s23, 3
      %p145 = por %p143, %p144
      %p146 = scmp.ne.s32.totalorder %s138, %s141
      %p147 = scmp.eq.s32.totalorder %s23, 0
      %p148 = por %p146, %p147
      %p149 = scmp.ne.s32.totalorder %s138, %s141
      %p150 = scmp.eq.s32.totalorder %s28, 3
      %p151 = por %p149, %p150
      %p152 = scmp.ne.s32.totalorder %s141, %s142
      %p153 = scmp.eq.s32.totalorder %s28, 0
      %p154 = por %p152, %p153
      %p155 = scmp.ne.s32.totalorder %s141, %s142
      %p156 = scmp.eq.s32.totalorder %s29, 3
      %p157 = por %p155, %p156
      %p159 = scmp.ne.s32.totalorder %s142, %s158
      %p160 = scmp.eq.s32.totalorder %s29, 0
      %p161 = por %p159, %p160
      %s162 = ssub.s32 %s32, %s41
      %p163 = scmp.eq.s32.totalorder %s162, 0
      %s165 = sadd.s32 %s164, 1
      %s166 = scalar_select %p163, %s164, %s165
      %p169 = pneg %p163
      %p170 = scmp.eq.s32.totalorder %s23, 3
      %p171 = por %p169, %p170
      %p172 = scmp.ne.s32.totalorder %s164, %s167
      %p173 = scmp.eq.s32.totalorder %s23, 0
      %p174 = por %p172, %p173
      %p175 = scmp.ne.s32.totalorder %s164, %s167
      %p176 = scmp.eq.s32.totalorder %s28, 3
      %p177 = por %p175, %p176
      %p178 = scmp.ne.s32.totalorder %s167, %s168
      %p179 = scmp.eq.s32.totalorder %s28, 0
      %p180 = por %p178, %p179
      %p181 = scmp.ne.s32.totalorder %s167, %s168
      %p182 = scmp.eq.s32.totalorder %s29, 3
      %p183 = por %p181, %p182
      %p185 = scmp.ne.s32.totalorder %s168, %s184
      %p186 = scmp.eq.s32.totalorder %s29, 0
      %p187 = por %p185, %p186
      %s188 = ssub.s32 %s32, %s41
      %p189 = scmp.eq.s32.totalorder %s188, 0
      %s191 = sadd.s32 %s190, 1
      %s192 = scalar_select %p189, %s190, %s191
      %p195 = pneg %p189
      %p196 = scmp.eq.s32.totalorder %s23, 3
      %p197 = por %p195, %p196
      %p198 = scmp.ne.s32.totalorder %s190, %s193
      %p199 = scmp.eq.s32.totalorder %s23, 0
      %p200 = por %p198, %p199
      %p201 = scmp.ne.s32.totalorder %s190, %s193
      %p202 = scmp.eq.s32.totalorder %s28, 3
      %p203 = por %p201, %p202
      %p204 = scmp.ne.s32.totalorder %s193, %s194
      %p205 = scmp.eq.s32.totalorder %s28, 0
      %p206 = por %p204, %p205
      %p207 = scmp.ne.s32.totalorder %s193, %s194
      %p208 = scmp.eq.s32.totalorder %s29, 3
      %p209 = por %p207, %p208
      %p211 = scmp.ne.s32.totalorder %s194, %s210
      %p212 = scmp.eq.s32.totalorder %s29, 0
      %p213 = por %p211, %p212
      %s215 = sadd.s32 %s214, 1
      %p218 = scmp.eq.s32.totalorder %s23, 3
      %p219 = scmp.ne.s32.totalorder %s214, %s216
      %p220 = scmp.eq.s32.totalorder %s23, 0
      %p221 = por %p219, %p220
      %p222 = scmp.ne.s32.totalorder %s214, %s216
      %p223 = scmp.eq.s32.totalorder %s28, 3
      %p224 = por %p222, %p223
      %p225 = scmp.ne.s32.totalorder %s216, %s217
      %p226 = scmp.eq.s32.totalorder %s28, 0
      %p227 = por %p225, %p226
      %p228 = scmp.ne.s32.totalorder %s216, %s217
      %p229 = scmp.eq.s32.totalorder %s29, 3
      %p230 = por %p228, %p229
      %p232 = scmp.ne.s32.totalorder %s217, %s231
      %p233 = scmp.eq.s32.totalorder %s29, 0
      %p234 = por %p232, %p233
      %s236 = sadd.s32 %s235, 1
      %p239 = scmp.eq.s32.totalorder %s23, 3
      %p240 = scmp.ne.s32.totalorder %s235, %s237
      %p241 = scmp.eq.s32.totalorder %s23, 0
      %p242 = por %p240, %p241
      %p243 = scmp.ne.s32.totalorder %s235, %s237
      %p244 = scmp.eq.s32.totalorder %s28, 3
      %p245 = por %p243, %p244
      %p246 = scmp.ne.s32.totalorder %s237, %s238
      %p247 = scmp.eq.s32.totalorder %s28, 0
      %p248 = por %p246, %p247
      %p249 = scmp.ne.s32.totalorder %s237, %s238
      %p250 = scmp.eq.s32.totalorder %s29, 3
      %p251 = por %p249, %p250
      %p253 = scmp.ne.s32.totalorder %s238, %s252
      %p254 = scmp.eq.s32.totalorder %s29, 0
      %p255 = por %p253, %p254
      %s256 = ssub.s32 %s30, %s49
      %s257 = ssub.s32 %s31, %s45
      %s258 = sor.u32 %s256, %s257
      %p259 = scmp.eq.s32.totalorder %s258, 0
      %s261 = sadd.s32 %s260, 1
      %s262 = scalar_select %p259, %s260, %s261
      %p265 = pneg %p259
      %p266 = scmp.eq.s32.totalorder %s23, 3
      %p267 = por %p265, %p266
      %p268 = scmp.ne.s32.totalorder %s260, %s263
      %p269 = scmp.eq.s32.totalorder %s23, 0
      %p270 = por %p268, %p269
      %p271 = scmp.ne.s32.totalorder %s260, %s263
      %p272 = scmp.eq.s32.totalorder %s28, 3
      %p273 = por %p271, %p272
      %p274 = scmp.ne.s32.totalorder %s263, %s264
      %p275 = scmp.eq.s32.totalorder %s28, 0
      %p276 = por %p274, %p275
      %p277 = scmp.ne.s32.totalorder %s263, %s264
      %p278 = scmp.eq.s32.totalorder %s29, 3
      %p279 = por %p277, %p278
      %p281 = scmp.ne.s32.totalorder %s264, %s280
      %p282 = scmp.eq.s32.totalorder %s29, 0
      %p283 = por %p281, %p282
      %s284 = ssub.s32 %s30, %s49
      %s285 = ssub.s32 %s32, %s41
      %s286 = sor.u32 %s284, %s285
      %s287 = ssub.s32 %s31, %s45
      %s288 = sor.u32 %s286, %s287
      %p289 = scmp.eq.s32.totalorder %s288, 0
      %s291 = sadd.s32 %s290, 1
      %s292 = scalar_select %p289, %s290, %s291
      %p295 = pneg %p289
      %p296 = scmp.eq.s32.totalorder %s23, 3
      %p297 = por %p295, %p296
      %p298 = scmp.ne.s32.totalorder %s290, %s293
      %p299 = scmp.eq.s32.totalorder %s23, 0
      %p300 = por %p298, %p299
      %p301 = scmp.ne.s32.totalorder %s290, %s293
      %p302 = scmp.eq.s32.totalorder %s28, 3
      %p303 = por %p301, %p302
      %p304 = scmp.ne.s32.totalorder %s293, %s294
      %p305 = scmp.eq.s32.totalorder %s28, 0
      %p306 = por %p304, %p305
      %p307 = scmp.ne.s32.totalorder %s293, %s294
      %p308 = scmp.eq.s32.totalorder %s29, 3
      %p309 = por %p307, %p308
      %p311 = scmp.ne.s32.totalorder %s294, %s310
      %p312 = scmp.eq.s32.totalorder %s29, 0
      %p313 = por %p311, %p312
      %s314 = ssub.s32 %s30, %s49
      %s315 = ssub.s32 %s31, %s45
      %s316 = sor.u32 %s314, %s315
      %p317 = scmp.eq.s32.totalorder %s316, 0
      %s319 = sadd.s32 %s318, 1
      %s320 = scalar_select %p317, %s318, %s319
      %p323 = pneg %p317
      %p324 = scmp.eq.s32.totalorder %s23, 3
      %p325 = por %p323, %p324
      %p326 = scmp.ne.s32.totalorder %s318, %s321
      %p327 = scmp.eq.s32.totalorder %s23, 0
      %p328 = por %p326, %p327
      %p329 = scmp.ne.s32.totalorder %s318, %s321
      %p330 = scmp.eq.s32.totalorder %s28, 3
      %p331 = por %p329, %p330
      %p332 = scmp.ne.s32.totalorder %s321, %s322
      %p333 = scmp.eq.s32.totalorder %s28, 0
      %p334 = por %p332, %p333
      %p335 = scmp.ne.s32.totalorder %s321, %s322
      %p336 = scmp.eq.s32.totalorder %s29, 3
      %p337 = por %p335, %p336
      %p339 = scmp.ne.s32.totalorder %s322, %s338
      %p340 = scmp.eq.s32.totalorder %s29, 0
      %p341 = por %p339, %p340
      %p342 = scmp.le.s32.totalorder 1, %s23
      %p343 = scmp.lt.s32.totalorder %s23, 5
      %p344 = pnand %p342, %p343
      %p345 = pneg %p344
      // Predicated region
      $region9: #{tpu_custom_call.1} parent=5 // pred_check
        _
      $region10: #{tpu_custom_call.1} parent=5 // pred_check_branch
        %347 = sbr.rel (%p344) target = $region12
      $region11: #{tpu_custom_call.1} parent=5 // pred_region
        %s348 = ssub.s32 %s23, 1
        // Predicated region
        $region13: #{tpu_custom_call.1} parent=11 // pred_check
          %p349 = pneg %p227
        $region14: #{tpu_custom_call.1} parent=11 // pred_check_branch
          %351 = sbr.rel (%p349) target = $region16
        $region15: #{tpu_custom_call.1} parent=11 // pred_region
          _
        $region16: #{tpu_custom_call.1} parent=11 // pred_fallthru
          _
        // Predicated region
        $region17: #{tpu_custom_call.1} parent=11 // pred_check
          %p352 = pneg %p248
        $region18: #{tpu_custom_call.1} parent=11 // pred_check_branch
          %354 = sbr.rel (%p352) target = $region20
        $region19: #{tpu_custom_call.1} parent=11 // pred_region
          _
        $region20: #{tpu_custom_call.1} parent=11 // pred_fallthru
          _
      $region12: #{tpu_custom_call.1} parent=5 // pred_fallthru
        _
      %p355 = scmp.lt.s32.totalorder %s23, 4
      // Predicated region
      $region21: #{tpu_custom_call.1} parent=5 // pred_check
        %p356 = pneg %p355
      $region22: #{tpu_custom_call.1} parent=5 // pred_check_branch
        %358 = sbr.rel (%p356) target = $region24
      $region23: #{tpu_custom_call.1} parent=5 // pred_region
        // Predicated region
        $region25: #{tpu_custom_call.1} parent=23 // pred_check
          %p359 = pneg %p64
        $region26: #{tpu_custom_call.1} parent=23 // pred_check_branch
          %361 = sbr.rel (%p359) target = $region28
        $region27: #{tpu_custom_call.1} parent=23 // pred_region
          %p362 = scmp.lt.s32.totalorder %s30, 1
          %s363 = scalar_select %p362, %s30, 1
          %p364 = scmp.lt.s32.totalorder %s31, 0
          %s365 = scalar_select %p364, %s31, 0
          %s366 = sadd.s32 %s365, %s363
          %s367 = smul.addr %s366, 8
          %s368 = scalar_lea.vmem %s0, %s367
        $region28: #{tpu_custom_call.1} parent=23 // pred_fallthru
          _
        // Predicated region
        $region29: #{tpu_custom_call.1} parent=23 // pred_check
          %p369 = pneg %p92
        $region30: #{tpu_custom_call.1} parent=23 // pred_check_branch
          %371 = sbr.rel (%p369) target = $region32
        $region31: #{tpu_custom_call.1} parent=23 // pred_region
          %p372 = scmp.lt.s32.totalorder %s30, 1
          %s373 = scalar_select %p372, %s30, 1
          %p374 = scmp.lt.s32.totalorder %s32, 1
          %s375 = scalar_select %p374, %s32, 1
          %s376 = smul.addr %s375, 2
          %s377 = smul.addr %s373, 4
          %s378 = sadd.s32 %s376, %s377
          %s379 = smul.addr %s378, 4
          %s380 = scalar_lea.vmem %s1, %s379
        $region32: #{tpu_custom_call.1} parent=23 // pred_fallthru
          _
        // Predicated region
        $region33: #{tpu_custom_call.1} parent=23 // pred_check
          %p381 = pneg %p120
        $region34: #{tpu_custom_call.1} parent=23 // pred_check_branch
          %383 = sbr.rel (%p381) target = $region36
        $region35: #{tpu_custom_call.1} parent=23 // pred_region
          %p384 = scmp.lt.s32.totalorder %s30, 1
          %s385 = scalar_select %p384, %s30, 1
          %p386 = scmp.lt.s32.totalorder %s32, 1
          %s387 = scalar_select %p386, %s32, 1
          %s388 = smul.addr %s385, 2
          %s389 = sadd.s32 %s387, %s388
          %s390 = smul.addr %s389, 4
          %s391 = scalar_lea.vmem %s2, %s390
        $region36: #{tpu_custom_call.1} parent=23 // pred_fallthru
          _
        // Predicated region
        $region37: #{tpu_custom_call.1} parent=23 // pred_check
          %p392 = pneg %p148
        $region38: #{tpu_custom_call.1} parent=23 // pred_check_branch
          %394 = sbr.rel (%p392) target = $region40
        $region39: #{tpu_custom_call.1} parent=23 // pred_region
          %p395 = scmp.lt.s32.totalorder %s30, 1
          %s396 = scalar_select %p395, %s30, 1
          %p397 = scmp.lt.s32.totalorder %s31, 0
          %s398 = scalar_select %p397, %s31, 0
          %s399 = sadd.s32 %s398, %s396
          %s400 = smul.addr %s399, 2
          %s401 = scalar_lea.vmem %s3, %s400
        $region40: #{tpu_custom_call.1} parent=23 // pred_fallthru
          _
        // Predicated region
        $region41: #{tpu_custom_call.1} parent=23 // pred_check
          %p402 = pneg %p174
        $region42: #{tpu_custom_call.1} parent=23 // pred_check_branch
          %404 = sbr.rel (%p402) target = $region44
        $region43: #{tpu_custom_call.1} parent=23 // pred_region
          %p405 = scmp.lt.s32.totalorder %s32, 1
          %s406 = scalar_select %p405, %s32, 1
          %s407 = smul.addr %s406, 4
          %s408 = smul.addr %s407, 4
          %s409 = scalar_lea.vmem %s4, %s408
        $region44: #{tpu_custom_call.1} parent=23 // pred_fallthru
          _
        // Predicated region
        $region45: #{tpu_custom_call.1} parent=23 // pred_check
          %p410 = pneg %p200
        $region46: #{tpu_custom_call.1} parent=23 // pred_check_branch
          %412 = sbr.rel (%p410) target = $region48
        $region47: #{tpu_custom_call.1} parent=23 // pred_region
          %p413 = scmp.lt.s32.totalorder %s32, 1
          %s414 = scalar_select %p413, %s32, 1
          %s415 = smul.addr %s414, 2
          %s416 = smul.addr %s415, 4
          %s417 = scalar_lea.vmem %s5, %s416
        $region48: #{tpu_custom_call.1} parent=23 // pred_fallthru
          _
      $region24: #{tpu_custom_call.1} parent=5 // pred_fallthru
        _
      %p418 = scmp.le.s32.totalorder 1, %s23
      %p419 = scmp.lt.s32.totalorder %s23, 5
      %p420 = pnand %p418, %p419
      %p421 = pneg %p420
      // Predicated region
      $region49: #{tpu_custom_call.1} parent=5 // pred_check
        _
      $region50: #{tpu_custom_call.1} parent=5 // pred_check_branch
        %423 = sbr.rel (%p420) target = $region52
      $region51: #{tpu_custom_call.1} parent=5 // pred_region
        %s424 = ssub.s32 %s23, 1
        %p425 = scmp.lt.s32.totalorder %s33, 1
        %s426 = scalar_select %p425, %s33, 1
        %p427 = scmp.lt.s32.totalorder %s34, 0
        %s428 = scalar_select %p427, %s34, 0
        %s429 = sadd.s32 %s428, %s426
        %s430 = smul.addr %s429, 8
        %s431 = scalar_lea.vmem %s0, %s430
        %p432 = pneg %p70
        %p433 = pneg %p67
        %p434 = scmp.lt.s32.totalorder %s33, 1
        %s435 = scalar_select %p434, %s33, 1
        %p436 = scmp.lt.s32.totalorder %s35, 1
        %s437 = scalar_select %p436, %s35, 1
        %s438 = smul.addr %s437, 2
        %s439 = smul.addr %s435, 4
        %s440 = sadd.s32 %s438, %s439
        %s441 = smul.addr %s440, 4
        %s442 = scalar_lea.vmem %s1, %s441
        %p443 = pneg %p98
        %p444 = pneg %p95
        %p445 = scmp.lt.s32.totalorder %s33, 1
        %s446 = scalar_select %p445, %s33, 1
        %p447 = scmp.lt.s32.totalorder %s35, 1
        %s448 = scalar_select %p447, %s35, 1
        %s449 = smul.addr %s446, 2
        %s450 = sadd.s32 %s448, %s449
        %s451 = smul.addr %s450, 4
        %s452 = scalar_lea.vmem %s2, %s451
        %p453 = pneg %p126
        %p454 = pneg %p123
        %p455 = scmp.lt.s32.totalorder %s33, 1
        %s456 = scalar_select %p455, %s33, 1
        %p457 = scmp.lt.s32.totalorder %s34, 0
        %s458 = scalar_select %p457, %s34, 0
        %s459 = sadd.s32 %s458, %s456
        %s460 = smul.addr %s459, 2
        %s461 = scalar_lea.vmem %s3, %s460
        %p462 = pneg %p154
        %p463 = pneg %p151
        %p464 = scmp.lt.s32.totalorder %s35, 1
        %s465 = scalar_select %p464, %s35, 1
        %s466 = smul.addr %s465, 4
        %s467 = smul.addr %s466, 4
        %s468 = scalar_lea.vmem %s4, %s467
        %p469 = pneg %p180
        %p470 = pneg %p177
        %p471 = scmp.lt.s32.totalorder %s35, 1
        %s472 = scalar_select %p471, %s35, 1
        %s473 = smul.addr %s472, 2
        %s474 = smul.addr %s473, 4
        %s475 = scalar_lea.vmem %s5, %s474
        %p476 = pneg %p206
        %p477 = pneg %p203
        %p478 = pneg %p227
        %p479 = pneg %p224
        %p480 = pneg %p248
        %p481 = pneg %p245
        %p482 = pneg %p276
        %p483 = pneg %p273
        %s484 = sand.u32 %s263, 1
        %s485 = scalar_lea.sflag [#allocation4], %s484
        %s486 = sand.u32 %s263, 1
        %s487 = smul.addr %s486, 8
        %s488 = scalar_lea.vmem [#allocation3], %s487
        %p489 = pneg %p306
        %p490 = pneg %p303
        %s491 = sand.u32 %s28, 1
        %s492 = scalar_lea.sflag [#allocation6], %s491
        %s493 = sand.u32 %s293, 1
        %s494 = smul.addr %s493, 8
        %s495 = scalar_lea.vmem [#allocation5], %s494
        %p496 = pneg %p334
        %p497 = pneg %p331
        %s498 = sand.u32 %s28, 1
        %s499 = scalar_lea.sflag [#allocation6], %s498
        %s500 = sand.u32 %s321, 1
        %s501 = smul.addr %s500, 8
        %s502 = scalar_lea.vmem [#allocation7], %s501
        %p503 = scmp.lt.s32.totalorder %s33, 1
        %s504 = scalar_select %p503, %s33, 1
        %p505 = scmp.lt.s32.totalorder %s34, 0
        %s506 = scalar_select %p505, %s34, 0
        %s507 = sadd.s32 %s506, %s504
        %s508 = smul.addr %s507, 8
        %s509 = scalar_lea.vmem %s0, %s508
        %p510 = scmp.lt.s32.totalorder %s33, 1
        %s511 = scalar_select %p510, %s33, 1
        %p512 = scmp.lt.s32.totalorder %s35, 1
        %s513 = scalar_select %p512, %s35, 1
        %s514 = smul.addr %s513, 2
        %s515 = smul.addr %s511, 4
        %s516 = sadd.s32 %s514, %s515
        %s517 = smul.addr %s516, 4
        %s518 = scalar_lea.vmem %s1, %s517
        %p519 = scmp.lt.s32.totalorder %s33, 1
        %s520 = scalar_select %p519, %s33, 1
        %p521 = scmp.lt.s32.totalorder %s35, 1
        %s522 = scalar_select %p521, %s35, 1
        %s523 = smul.addr %s520, 2
        %s524 = sadd.s32 %s522, %s523
        %s525 = smul.addr %s524, 4
        %s526 = scalar_lea.vmem %s2, %s525
        %p527 = scmp.lt.s32.totalorder %s33, 1
        %s528 = scalar_select %p527, %s33, 1
        %p529 = scmp.lt.s32.totalorder %s34, 0
        %s530 = scalar_select %p529, %s34, 0
        %s531 = sadd.s32 %s530, %s528
        %s532 = smul.addr %s531, 2
        %s533 = scalar_lea.vmem %s3, %s532
        %p534 = scmp.lt.s32.totalorder %s35, 1
        %s535 = scalar_select %p534, %s35, 1
        %s536 = smul.addr %s535, 4
        %s537 = smul.addr %s536, 4
        %s538 = scalar_lea.vmem %s4, %s537
        %p539 = scmp.lt.s32.totalorder %s35, 1
        %s540 = scalar_select %p539, %s35, 1
        %s541 = smul.addr %s540, 2
        %s542 = smul.addr %s541, 4
        %s543 = scalar_lea.vmem %s5, %s542
        %p545 = scmp.eq.s32.totalorder %s35, 0
        // Predicated region
        $region53: #{tpu_custom_call.1} parent=51 // pred_check
          %p546 = pneg %p545
        $region54: #{tpu_custom_call.1} parent=51 // pred_check_branch
          %548 = sbr.rel (%p546) target = $region56
        $region55: #{tpu_custom_call.1} parent=51 // pred_region
          %vm549 = vcmask 261120
          %550 = vst.msk [vmem:[#allocation2] sm:$0xff] %vm549, 0.0
        $region56: #{tpu_custom_call.1} parent=51 // pred_fallthru
          _
        %v551 = vld [vmem:[%s509] sm:$0xff]
        %v552 = vpack.c.bf16 %v551, %v551
        %v553 = vld [vmem:[%s538] sm:$0xf]
        %v554 = vld [vmem:[%s538 + $0x4] sm:$0xf]
        %v555 = vld [vmem:[%s538 + $0x8] sm:$0xf]
        %v556 = vld [vmem:[%s538 + $0xc] sm:$0xf]
        %v561 = vunpack.c.l.b16 %v553
        %v562 = vunpack.c.l.b16 %v554
        %v563 = vunpack.c.l.b16 %v555
        %v564 = vunpack.c.l.b16 %v556
        %v565 = vpack.c.b16 %v562, %v561
        %v566 = vpack.c.b16 %v564, %v563
        %vm569 = vcmask 261120
        %v571 = vsel %vm569, %v552, 0
        %573 = vmatpush.bf16.msra.mxu0 0
        %574 = vmatpush.bf16.msra.mxu0 0
        %575 = vmatpush.bf16.msra.mxu0 0
        %576 = vmatpush.bf16.msra.mxu0 0
        %577 = vmatpush.bf16.msra.mxu0 0
        %578 = vmatpush.bf16.msra.mxu0 0
        %579 = vmatpush.bf16.msra.mxu0 %v566
        %580 = vmatpush.bf16.msra.mxu0 %v565
        %581 = vmatmul.bf16.gmra.mxu0 %v571
        %v582 = vpop.f32.mrf.mxu0
        %v583 = vadd.f32 0.0, %v582
        %v584 = vpop.f32.mrf.mxu0
        %585 = vdwg.mxu0
        %v586 = vpack.c.bf16 %v583, %v583
        %v587 = vld [vmem:[%s518] sm:$0xf]
        %v588 = vld [vmem:[%s518 + $0x4] sm:$0xf]
        %v591 = vunpack.c.l.b16 %v587
        %v592 = vunpack.c.l.b16 %v588
        %v593 = vpack.c.b16 %v592, %v591
        %vm595 = vcmask 130048
        %v597 = vsel %vm595, %v586, 0
        %599 = vmatpush.bf16.msra.mxu0 0
        %600 = vmatpush.bf16.msra.mxu0 0
        %601 = vmatpush.bf16.msra.mxu0 0
        %602 = vmatpush.bf16.msra.mxu0 0
        %603 = vmatpush.bf16.msra.mxu0 0
        %604 = vmatpush.bf16.msra.mxu0 0
        %605 = vmatpush.bf16.msra.mxu0 0
        %606 = vmatpush.bf16.msra.mxu0 %v593
        %607 = vmatmul.bf16.gmra.mxu0 %v597
        %v608 = vpop.f32.mrf.mxu0
        %v609 = vadd.f32 0.0, %v608
        %v610 = vpop.f32.mrf.mxu0
        %611 = vdwg.mxu0
        %v612 = vld [vmem:[%s533] sm:$0x3]
        %v613 = vunpack.c.0.s8 %v612
        %v614 = vcvt.s32.f32 %v613
        %vm615 = vcmp.ne.f32.partialorder %v614, 0.0
        %v616 = vsel %vm615, %v609, -1e+09
        %vm617 = vcmask 64512
        %v618 = vsel %vm617, %v616, -inf
        %619 = vmax.xlane.f32.xlu0 %v618
        %v620 = vpop.xlane.xlu0 %619
        %v621 = vsub.f32 %v616, %v620
        %v622 = vmul.f32 %v621, 1.442695
        %v623 = vpow.pop %v622
        %v624 = vsel %vm617, %v623, 0.0
        %625 = vadd.xlane.f32.xlu0 %v624
        %v626 = vpop.xlane.xlu0 %625
        %v627 = vrcp.pop %v626
        %v628 = vmul.f32 %v626, %v627
        %v629 = vsub.f32 1.0, %v628
        %v630 = vmul.f32 %v627, %v629
        %v631 = vadd.f32 %v627, %v630
        %vm632 = vweird.f32 %v626
        %vm633 = vweird.f32 %v627
        %vm634 = vmor %vm632, %vm633
        %v635 = vsel %vm634, %v627, %v631
        %v636 = vand.u32 2147483647, %v626
        %vm637 = vcmp.eq.f32.partialorder %v636, 8.507059e+37
        %v638 = vand.u32 %v626, 2147483648
        %v639 = vor.u32 1.1754944e-38, %v638
        %v640 = vsel %vm637, %v639, %v635
        %v641 = vmul.f32 %v623, %v640
        %642 = vst.msk [vmem:[%s495] sm:$0xff] %vm617, %v641
        %v643 = vpack.c.bf16 %v641, %v641
        %v644 = vld [vmem:[%s526] sm:$0xf]
        %v646 = vsel %vm617, %v643, 0
        %vm648 = vcmask 1043456
        %v650 = vsel %vm648, %v644, 0
        %652 = vmatpush.bf16.msra.mxu0 0
        %653 = vmatpush.bf16.msra.mxu0 0
        %654 = vmatpush.bf16.msra.mxu0 0
        %655 = vmatpush.bf16.msra.mxu0 0
        %656 = vmatpush.bf16.msra.mxu0 0
        %657 = vmatpush.bf16.msra.mxu0 0
        %658 = vmatpush.bf16.msra.mxu0 0
        %659 = vmatpush.bf16.msra.mxu0 %v650
        %660 = vmatmul.bf16.gmra.mxu0 %v646
        %v661 = vpop.f32.mrf.mxu0
        %v662 = vadd.f32 0.0, %v661
        %v663 = vpop.f32.mrf.mxu0
        %664 = vdwg.mxu0
        %v665 = vld [vmem:[#allocation2] sm:$0xff]
        %v666 = vpack.c.bf16 %v662, %v662
        %v667 = vld [vmem:[%s543] sm:$0xf]
        %v668 = vld [vmem:[%s543 + $0x4] sm:$0xf]
        %v671 = vunpack.c.l.b16 %v667
        %v672 = vunpack.c.l.b16 %v668
        %v673 = vpack.c.b16 %v672, %v671
        %v676 = vsel %vm595, %v666, 0
        %678 = vmatpush.bf16.msra.mxu0 0
        %679 = vmatpush.bf16.msra.mxu0 0
        %680 = vmatpush.bf16.msra.mxu0 0
        %681 = vmatpush.bf16.msra.mxu0 0
        %682 = vmatpush.bf16.msra.mxu0 0
        %683 = vmatpush.bf16.msra.mxu0 0
        %684 = vmatpush.bf16.msra.mxu0 0
        %685 = vmatpush.bf16.msra.mxu0 %v673
        %686 = vmatmul.bf16.gmra.mxu0 %v676
        %v687 = vpop.f32.mrf.mxu0
        %v688 = vadd.f32 0.0, %v687
        %v689 = vpop.f32.mrf.mxu0
        %690 = vdwg.mxu0
        %v691 = vadd.f32 %v665, %v688
        %692 = vst.msk [vmem:[#allocation2] sm:$0xff] %vm569, %v691
        %p693 = scmp.eq.s32.totalorder %s35, 1
        // Predicated region
        $region57: #{tpu_custom_call.1} parent=51 // pred_check
          %p694 = pneg %p693
        $region58: #{tpu_custom_call.1} parent=51 // pred_check_branch
          %696 = sbr.rel (%p694) target = $region60
        $region59: #{tpu_custom_call.1} parent=51 // pred_region
          %v697 = vld [vmem:[#allocation2] sm:$0xff]
          %698 = vst.msk [vmem:[%s502] sm:$0xff] %vm569, %v697
          %v699 = vadd.f32 %v697, %v551
          %v700 = vsel %vm569, %v699, 0.0
          %701 = vadd.xlane.f32.xlu0 %v700
          %v702 = vpop.xlane.xlu0 %701
          %v703 = vrcp.pop 32.0
          %v704 = vmul.f32 32.0, %v703
          %v705 = vsub.f32 1.0, %v704
          %v706 = vmul.f32 %v703, %v705
          %v707 = vadd.f32 %v703, %v706
          %vm708 = vweird.f32 %v703
          %v709 = vsel %vm708, %v703, %v707
          %v710 = vmul.f32 %v702, %v709
          %v711 = vsub.f32 %v699, %v710
          %v712 = vmul.f32 %v711, %v711
          %v713 = vsel %vm569, %v712, 0.0
          %714 = vadd.xlane.f32.xlu0 %v713
          %v715 = vpop.xlane.xlu0 %714
          %v716 = vmul.f32 %v715, %v709
          %v717 = vadd.f32 %v716, 1e-06
          %v718 = vrsqrt.pop %v717
          %v719 = vmul.f32 %v718, %v717
          %v720 = vmul.f32 %v719, %v718
          %v721 = vmul.f32 0.5, %v720
          %v722 = vsub.f32 1.5, %v721
          %v723 = vmul.f32 %v718, %v722
          %vm724 = vweird.f32 %v717
          %vm725 = vweird.f32 %v718
          %vm726 = vmor %vm724, %vm725
          %v727 = vsel %vm726, %v718, %v723
          %v728 = vmul.f32 %v711, %v727
          %v729 = vld [vmem:[%s6] sm:$0x1]
          %v731 = vperm.slane %v729, 0
          %v733 = vmul.f32 %v728, %v731
          %v734 = vld [vmem:[%s7] sm:$0x1]
          %v736 = vperm.slane %v734, 0
          %v738 = vadd.f32 %v733, %v736
          %739 = vst.msk [vmem:[%s488] sm:$0xff] %vm569, %v738
        $region60: #{tpu_custom_call.1} parent=51 // pred_fallthru
          _
        %s740 = sand.u32 %s263, 1
        %s741 = scalar_lea.sflag [#allocation4], %s740
        %s742 = sand.u32 %s263, 1
        %s743 = smul.addr %s742, 8
        %s744 = scalar_lea.vmem [#allocation3], %s743
        %s745 = sand.u32 %s28, 1
        %s746 = scalar_lea.sflag [#allocation6], %s745
        %s747 = sand.u32 %s293, 1
        %s748 = smul.addr %s747, 8
        %s749 = scalar_lea.vmem [#allocation5], %s748
        %s750 = sand.u32 %s28, 1
        %s751 = scalar_lea.sflag [#allocation6], %s750
        %s752 = sand.u32 %s321, 1
        %s753 = smul.addr %s752, 8
        %s754 = scalar_lea.vmem [#allocation7], %s753
        // Predicated region
        $region61: #{tpu_custom_call.1} parent=51 // pred_check
          %p755 = pneg %p273
        $region62: #{tpu_custom_call.1} parent=51 // pred_check_branch
          %757 = sbr.rel (%p755) target = $region64
        $region63: #{tpu_custom_call.1} parent=51 // pred_region
          %759 = vsyncadd %s741, 0
          %s760 = sadd.s32 %s34, %s33
          %s761 = smul.addr %s760, 8
          %s762 = scalar_lea.hbm %s8, %s761
          %s764 = sshll.u32 %s744, 4
          %s765 = int_to_ptr.vmem [resolvable:$true] %s764
          %s766 = sshll.u32 %s762, 4
          %s767 = int_to_ptr.hbm [resolvable:$true] %s766
          %769 = dma.vmem_to_hbm [thread:$0]  %s765, 128, %s767, %s741
        $region64: #{tpu_custom_call.1} parent=51 // pred_fallthru
          _
        // Predicated region
        $region65: #{tpu_custom_call.1} parent=51 // pred_check
          %p770 = pneg %p303
        $region66: #{tpu_custom_call.1} parent=51 // pred_check_branch
          %772 = sbr.rel (%p770) target = $region68
        $region67: #{tpu_custom_call.1} parent=51 // pred_region
          %774 = vsyncadd %s746, 0
          %s775 = sadd.s32 %s34, %s35
          %s776 = smul.addr %s33, 2
          %s777 = sadd.s32 %s775, %s776
          %s778 = smul.addr %s777, 8
          %s779 = scalar_lea.hbm %s9, %s778
          %s781 = sshll.u32 %s749, 4
          %s782 = int_to_ptr.vmem [resolvable:$true] %s781
          %s783 = sshll.u32 %s779, 4
          %s784 = int_to_ptr.hbm [resolvable:$true] %s783
          %786 = dma.vmem_to_hbm [thread:$0]  %s782, 128, %s784, %s746
        $region68: #{tpu_custom_call.1} parent=51 // pred_fallthru
          _
        // Predicated region
        $region69: #{tpu_custom_call.1} parent=51 // pred_check
          %p787 = pneg %p331
        $region70: #{tpu_custom_call.1} parent=51 // pred_check_branch
          %789 = sbr.rel (%p787) target = $region72
        $region71: #{tpu_custom_call.1} parent=51 // pred_region
          %791 = vsyncadd %s751, 0
          %s792 = sadd.s32 %s34, %s33
          %s793 = smul.addr %s792, 8
          %s794 = scalar_lea.hbm %s10, %s793
          %s796 = sshll.u32 %s754, 4
          %s797 = int_to_ptr.vmem [resolvable:$true] %s796
          %s798 = sshll.u32 %s794, 4
          %s799 = int_to_ptr.hbm [resolvable:$true] %s798
          %801 = dma.vmem_to_hbm [thread:$0]  %s797, 128, %s799, %s751
        $region72: #{tpu_custom_call.1} parent=51 // pred_fallthru
          _
      $region52: #{tpu_custom_call.1} parent=5 // pred_fallthru
        _
      %p802 = scmp.le.s32.totalorder 2, %s23
      // Predicated region
      $region73: #{tpu_custom_call.1} parent=5 // pred_check
        %p803 = pneg %p802
      $region74: #{tpu_custom_call.1} parent=5 // pred_check_branch
        %805 = sbr.rel (%p803) target = $region76
      $region75: #{tpu_custom_call.1} parent=5 // pred_region
        %s806 = ssub.s32 %s23, 2
        // Predicated region
        $region77: #{tpu_custom_call.1} parent=75 // pred_check
          %p807 = pneg %p279
        $region78: #{tpu_custom_call.1} parent=75 // pred_check_branch
          %809 = sbr.rel (%p807) target = $region80
        $region79: #{tpu_custom_call.1} parent=75 // pred_region
          %s810 = sand.u32 %s264, 1
          %s811 = scalar_lea.sflag [#allocation4], %s810
          %s812 = sand.u32 %s264, 1
          %s813 = smul.addr %s812, 8
          %s814 = scalar_lea.vmem [#allocation3], %s813
          %816 = dma.done %s811, 128
        $region80: #{tpu_custom_call.1} parent=75 // pred_fallthru
          _
        // Predicated region
        $region81: #{tpu_custom_call.1} parent=75 // pred_check
          %p817 = pneg %p309
        $region82: #{tpu_custom_call.1} parent=75 // pred_check_branch
          %819 = sbr.rel (%p817) target = $region84
        $region83: #{tpu_custom_call.1} parent=75 // pred_region
          %s820 = sand.u32 %s29, 1
          %s821 = scalar_lea.sflag [#allocation6], %s820
          %s822 = sand.u32 %s294, 1
          %s823 = smul.addr %s822, 8
          %s824 = scalar_lea.vmem [#allocation5], %s823
          %826 = dma.done %s821, 128
        $region84: #{tpu_custom_call.1} parent=75 // pred_fallthru
          _
        // Predicated region
        $region85: #{tpu_custom_call.1} parent=75 // pred_check
          %p827 = pneg %p337
        $region86: #{tpu_custom_call.1} parent=75 // pred_check_branch
          %829 = sbr.rel (%p827) target = $region88
        $region87: #{tpu_custom_call.1} parent=75 // pred_region
          %s830 = sand.u32 %s29, 1
          %s831 = scalar_lea.sflag [#allocation6], %s830
          %s832 = sand.u32 %s322, 1
          %s833 = smul.addr %s832, 8
          %s834 = scalar_lea.vmem [#allocation7], %s833
          %836 = dma.done %s831, 128
        $region88: #{tpu_custom_call.1} parent=75 // pred_fallthru
          _
      $region76: #{tpu_custom_call.1} parent=5 // pred_fallthru
        _
    $region6: #{tpu_custom_call.1} parent=1 // loop_footer
      %s27 = sadd.s32 1, %s23
    $region7: #{tpu_custom_call.1} parent=1 // loop_footer_branch
      %22 = sbr.rel target = $region3
    $region8: #{tpu_custom_call.1} parent=1 // loop_exit
      _
    %837 = vsyncpa [#allocation4], 1
    %s838 = scalar_lea.sflag [#allocation4], 1
    %839 = vsyncpa %s838, 1
    %840 = vsyncpa [#allocation6], 1
    %s841 = scalar_lea.sflag [#allocation6], 1
    %842 = vsyncpa %s841, 1

</llo_original>
